<compile_context>
chip_gen: v5e
topology: v5e:2x2
jax: 0.10.0
libtpu: 0.0.40
codegen_flags: <defaults>
</compile_context>

<pallas_src>
import functools

import jax
import jax.numpy as jnp
from jax.experimental import pallas as pl
from jax.experimental.pallas import tpu as pltpu


def _pick_n_tile(n, d, max_tile_bytes=2 << 20):
    """Largest lane-dense (multiple-of-128) tile dividing N under a VMEM cap."""
    for tn in (2048, 1024, 512, 384, 256, 128):
        if n % tn == 0 and d * tn * 4 <= max_tile_bytes:
            return tn
    return n  # block == full array extent is always legal


def _power_v_kernel(it_k, f_ref, v0_ref, v_ref, g_ref):
    """Pass 1: accumulate G = F F^T over N tiles (MXU), then power-iterate v.

    f_ref : (D, TN) f32  -- one N-tile of one batch, natural NCHW (D, N) layout
    v0_ref: (D, 1)  f32  -- initial random vector (torch column layout)
    v_ref : (D, 1)  f32  -- output: L2-normalized dominant direction
    g_ref : (D, D)  f32  -- VMEM scratch Gram accumulator
    """
    j = pl.program_id(1)

    @pl.when(j == 0)
    def _():
        g_ref[...] = jnp.zeros_like(g_ref)

    ft = f_ref[...]                                            # (D, TN)
    # G += Ft @ Ft^T (contract over the lane-dense N axis) -- one MXU matmul.
    g_ref[...] += jax.lax.dot_general(
        ft, ft, (((1,), (1,)), ((), ())),
        preferred_element_type=jnp.float32)

    @pl.when(j == pl.num_programs(1) - 1)
    def _():
        g = g_ref[...]                                         # (D, D)
        v = v0_ref[...]                                        # (D, 1)
        # v <- F^T (F v) == G v (G symmetric), it_k times; tiny MXU matmuls.
        for _ in range(it_k):
            v = jnp.dot(g, v, preferred_element_type=jnp.float32)
        # torch.nn.functional.normalize(v, dim=1, eps=1e-12); rsqrt -> EUP.
        nsq = jnp.sum(v * v, axis=0, keepdims=True)            # (1, 1)
        v_ref[...] = v * jax.lax.rsqrt(jnp.maximum(nsq, jnp.float32(1e-24)))


def _deflate_kernel(eta, f_ref, v_ref, o_ref):
    """Pass 2: Fk = F - eta * (F v) v^T, emitted directly in (N, D) layout.

    f_ref: (D, TN) f32; v_ref: (D, 1) f32 (already normalized); o_ref: (TN, D).
    """
    ft = f_ref[...]                                            # (D, TN)
    v = v_ref[...]                                             # (D, 1)
    # u = v^T F: contract over D on the MXU; lane-dense (1, TN) result.
    u = jax.lax.dot_general(
        v, ft, (((0,), (0,)), ((), ())),
        preferred_element_type=jnp.float32)                    # (1, TN)
    # Rank-1 deflation in the natural (D, TN) layout (lane-dense VPU work),
    # then one XLU transpose to write the torch (N, D) layout directly.
    o_ref[...] = jnp.transpose(ft - v * (eta * u))             # (TN, D)


def run_forward(features, v0, it_k=2, eta=1.0, n_tile=None):
    """features: (B, D, W, H) NCHW; v0: (B, D, 1) (stand-in for torch.rand).

    Returns Fk with shape (B, W*H, D), identical to the PyTorch module.
    """
    B, D, W, H = features.shape
    N = W * H
    # Natural NCHW view: a free reshape, no host-side transpose of the
    # feature map (the kernels work in (D, N) layout and transpose per tile).
    f = features.reshape(B, D, N).astype(jnp.float32)
    v0_col = v0.astype(jnp.float32).reshape(B, D, 1)

    tn = _pick_n_tile(N, D) if n_tile is None else int(n_tile)
    assert N % tn == 0, (N, tn)
    n_tiles = N // tn
    blk_bytes = D * tn * 4
    # Explicit scoped-VMEM budget with headroom for double-buffered F / out
    # blocks, the (D,D) scratch and transpose temporaries; v7x-safe cap.
    vmem_limit = int(min(64 << 20, max(16 << 20, 10 * blk_bytes + (2 << 20))))

    # ---- pass 1: v = normalize(G^it_k v0),  G = F F^T accumulated over N tiles
    v = pl.pallas_call(
        functools.partial(_power_v_kernel, it_k),
        out_shape=jax.ShapeDtypeStruct((B, D, 1), jnp.float32),
        grid_spec=pltpu.PrefetchScalarGridSpec(
            num_scalar_prefetch=0,
            grid=(B, n_tiles),
            in_specs=[
                pl.BlockSpec((None, D, tn), lambda b, j: (b, 0, j)),
                pl.BlockSpec((None, D, 1), lambda b, j: (b, 0, 0)),
            ],
            out_specs=pl.BlockSpec((None, D, 1), lambda b, j: (b, 0, 0)),
            scratch_shapes=[pltpu.VMEM((D, D), jnp.float32)],
        ),
        compiler_params=pltpu.CompilerParams(
            dimension_semantics=("parallel", "arbitrary"),
            vmem_limit_bytes=vmem_limit),
    )(f, v0_col)

    # ---- pass 2: Fk = F - eta * (F v) v^T, one (TN, D) output block per step
    fk = pl.pallas_call(
        functools.partial(_deflate_kernel, float(eta)),
        out_shape=jax.ShapeDtypeStruct((B, N, D), jnp.float32),
        grid_spec=pltpu.PrefetchScalarGridSpec(
            num_scalar_prefetch=0,
            grid=(B, n_tiles),
            in_specs=[
                pl.BlockSpec((None, D, tn), lambda b, j: (b, 0, j)),
                pl.BlockSpec((None, D, 1), lambda b, j: (b, 0, 0)),
            ],
            out_specs=pl.BlockSpec((None, tn, D), lambda b, j: (b, j, 0)),
        ),
        compiler_params=pltpu.CompilerParams(
            dimension_semantics=("parallel", "parallel"),
            vmem_limit_bytes=vmem_limit),
    )(f, v)
    return fk


def _ref_forward(features, v0, it_k=2, eta=1.0):
    """Pure-JAX reference mirroring the torch module exactly."""
    B, D, W, H = features.shape
    F = jnp.transpose(features.reshape(B, D, W * H), (0, 2, 1))   # (B, N, D)
    v = v0                                                        # (B, D, 1)
    for _ in range(it_k):
        v = jnp.einsum('bnd,bdk->bnk', F, v)                      # F @ v
        v = jnp.einsum('bnd,bnk->bdk', F, v)                      # F^T @ v
    norm = jnp.sqrt(jnp.sum(v * v, axis=1, keepdims=True))
    v = v / jnp.maximum(norm, 1e-12)
    Fv = jnp.einsum('bnd,bdk->bnk', F, v)
    return F - eta * jnp.einsum('bnk,bdk->bnd', Fv, v)


if __name__ == "__main__":
    key = jax.random.PRNGKey(0)

    def _check(B, D, W, H, it_k=2, eta=1.0, n_tile=None):
        k1, k2 = jax.random.split(jax.random.fold_in(key, B * 10000 + D * 100 + W + H))
        features = jax.random.normal(k1, (B, D, W, H), dtype=jnp.float32)
        # TODO(synk): torch.rand inside forward() is non-deterministic RNG; it is
        # taken here as an explicit deterministic input v0 instead.
        v0 = jax.random.uniform(k2, (B, D, 1), dtype=jnp.float32)
        out = jax.block_until_ready(
            run_forward(features, v0, it_k=it_k, eta=eta, n_tile=n_tile))
        ref = _ref_forward(features, v0, it_k=it_k, eta=eta)
        assert out.shape == (B, W * H, D), out.shape
        assert jnp.allclose(out, ref, atol=5e-4, rtol=5e-4), \
            f"mismatch vs reference for shape {(B, D, W, H)}"

    # primary small shape implied by the module (single N tile)
    _check(2, 4, 16, 16)
    # default tile picker -> multi-tile Gram accumulation (N=1536 -> 3x512)
    _check(1, 4, 32, 48)
    # forced small tiles: exercises 8-step reduction over the N axis
    _check(1, 4, 32, 32, n_tile=128)
    print("KERNEL_OK")
</pallas_src>

<mosaic_0001>
module attributes {stable_mosaic.version = 11 : i64} {
  func.func @_power_v_kernel(%arg0: i32, %arg1: i32, %arg2: memref<1x4x256xf32, #tpu.memory_space<vmem>>, %arg3: memref<1x4x1xf32, #tpu.memory_space<vmem>>, %arg4: memref<1x4x1xf32, #tpu.memory_space<vmem>>, %arg5: memref<4x4xf32, #tpu.memory_space<vmem>>) attributes {dimension_semantics = [#tpu.dimension_semantics<parallel>, #tpu.dimension_semantics<arbitrary>], iteration_bounds = array<i64: 2, 1>, scalar_prefetch = 0 : i64, scratch_operands = 1 : i64, tpu.core_type = #tpu.core_type<tc>, window_params = [{transform_indices = @transform_0, window_bounds = array<i64: 1, 4, 256>}, {transform_indices = @transform_1, window_bounds = array<i64: 1, 4, 1>}, {transform_indices = @transform_2, window_bounds = array<i64: 1, 4, 1>}]} {
    %c0_i32 = arith.constant 0 : i32
    %0 = arith.cmpi eq, %arg1, %c0_i32 : i32
    %1 = arith.extui %0 : i1 to i32
    %c0_i32_0 = arith.constant 0 : i32
    %2 = arith.cmpi ne, %1, %c0_i32_0 : i32
    scf.if %2 {
      %cst_9 = arith.constant 0.000000e+00 : f32
      %12 = vector.broadcast %cst_9 : f32 to vector<4x4xf32>
      %c0_10 = arith.constant 0 : index
      %c0_11 = arith.constant 0 : index
      %13 = vector.load %arg5[%c0_10, %c0_11] : memref<4x4xf32, #tpu.memory_space<vmem>>, vector<4x4xf32>
      tpu.vector_store %arg5[%c0_10, %c0_11], %12 {strides = array<i32>} : memref<4x4xf32, #tpu.memory_space<vmem>>, vector<4x4xf32>,
    } else {
    }
    %c0 = arith.constant 0 : index
    %c0_1 = arith.constant 0 : index
    %c0_2 = arith.constant 0 : index
    %3 = vector.load %arg2[%c0, %c0_1, %c0_2] : memref<1x4x256xf32, #tpu.memory_space<vmem>>, vector<1x4x256xf32>
    %4 = vector.shape_cast %3 : vector<1x4x256xf32> to vector<4x256xf32>
    %c0_3 = arith.constant 0 : index
    %c0_4 = arith.constant 0 : index
    %5 = vector.load %arg5[%c0_3, %c0_4] : memref<4x4xf32, #tpu.memory_space<vmem>>, vector<4x4xf32>
    %cst = arith.constant dense<0.000000e+00> : vector<4x4xf32>
    %6 = tpu.matmul %4, %4, %cst {dimension_numbers = #tpu.dot_dimension_numbers<[1], [1], [0], [0], [0, 0, 1, 0], [], []>} : vector<4x256xf32>, vector<4x256xf32>, vector<4x4xf32> -> vector<4x4xf32>
    %7 = arith.addf %5, %6 : vector<4x4xf32>
    %c0_5 = arith.constant 0 : index
    %c0_6 = arith.constant 0 : index
    %8 = vector.load %arg5[%c0_5, %c0_6] : memref<4x4xf32, #tpu.memory_space<vmem>>, vector<4x4xf32>
    tpu.vector_store %arg5[%c0_5, %c0_6], %7 {strides = array<i32>} : memref<4x4xf32, #tpu.memory_space<vmem>>, vector<4x4xf32>,
    %c0_i32_7 = arith.constant 0 : i32
    %9 = arith.cmpi eq, %arg1, %c0_i32_7 : i32
    %10 = arith.extui %9 : i1 to i32
    %c0_i32_8 = arith.constant 0 : i32
    %11 = arith.cmpi ne, %10, %c0_i32_8 : i32
    scf.if %11 {
      %c0_9 = arith.constant 0 : index
      %c0_10 = arith.constant 0 : index
      %12 = vector.load %arg5[%c0_9, %c0_10] : memref<4x4xf32, #tpu.memory_space<vmem>>, vector<4x4xf32>
      %c0_11 = arith.constant 0 : index
      %c0_12 = arith.constant 0 : index
      %c0_13 = arith.constant 0 : index
      %13 = vector.load %arg3[%c0_11, %c0_12, %c0_13] : memref<1x4x1xf32, #tpu.memory_space<vmem>>, vector<1x4x1xf32>
      %14 = vector.shape_cast %13 : vector<1x4x1xf32> to vector<4x1xf32>
      %cst_14 = arith.constant dense<0.000000e+00> : vector<4x1xf32>
      %15 = tpu.matmul %12, %14, %cst_14 {dimension_numbers = #tpu.dot_dimension_numbers<[1], [0], [0], [1], [0, 0, 1, 1], [], []>} : vector<4x4xf32>, vector<4x1xf32>, vector<4x1xf32> -> vector<4x1xf32>
      %cst_15 = arith.constant dense<0.000000e+00> : vector<4x1xf32>
      %16 = tpu.matmul %12, %15, %cst_15 {dimension_numbers = #tpu.dot_dimension_numbers<[1], [0], [0], [1], [0, 0, 1, 1], [], []>} : vector<4x4xf32>, vector<4x1xf32>, vector<4x1xf32> -> vector<4x1xf32>
      %17 = arith.mulf %16, %16 : vector<4x1xf32>
      %cst_16 = arith.constant dense<0.000000e+00> : vector<1xf32>
      %18 = vector.multi_reduction <add>, %17, %cst_16 [0] : vector<4x1xf32> to vector<1xf32>
      %19 = vector.shape_cast %18 : vector<1xf32> to vector<1x1xf32>
      %cst_17 = arith.constant 1.000000e-24 : f32
      %20 = vector.broadcast %cst_17 : f32 to vector<1x1xf32>
      %21 = arith.maximumf %19, %20 : vector<1x1xf32>
      %22 = math.rsqrt %21 : vector<1x1xf32>
      %23 = vector.broadcast %22 : vector<1x1xf32> to vector<4x1xf32>
      %24 = arith.mulf %16, %23 : vector<4x1xf32>
      %c0_18 = arith.constant 0 : index
      %c0_19 = arith.constant 0 : index
      %c0_20 = arith.constant 0 : index
      %25 = vector.load %arg4[%c0_18, %c0_19, %c0_20] : memref<1x4x1xf32, #tpu.memory_space<vmem>>, vector<1x4x1xf32>
      %26 = vector.shape_cast %25 : vector<1x4x1xf32> to vector<4x1xf32>
      %27 = vector.shape_cast %24 : vector<4x1xf32> to vector<1x4x1xf32>
      tpu.vector_store %arg4[%c0_18, %c0_19, %c0_20], %27 {strides = array<i32>} : memref<1x4x1xf32, #tpu.memory_space<vmem>>, vector<1x4x1xf32>,
    } else {
    }
    return
  }
  func.func @transform_0(%arg0: i32, %arg1: i32) -> (i32, i32, i32) {
    %c0_i32 = arith.constant 0 : i32
    %c0_i32_0 = arith.constant 0 : i32
    return %arg0, %c0_i32, %arg1 : i32, i32, i32
  }
  func.func @transform_1(%arg0: i32, %arg1: i32) -> (i32, i32, i32) {
    %c0_i32 = arith.constant 0 : i32
    %c0_i32_0 = arith.constant 0 : i32
    %c0_i32_1 = arith.constant 0 : i32
    return %arg0, %c0_i32, %c0_i32_0 : i32, i32, i32
  }
  func.func @transform_2(%arg0: i32, %arg1: i32) -> (i32, i32, i32) {
    %c0_i32 = arith.constant 0 : i32
    %c0_i32_0 = arith.constant 0 : i32
    %c0_i32_1 = arith.constant 0 : i32
    return %arg0, %c0_i32, %c0_i32_0 : i32, i32, i32
  }
}

</mosaic_0001>

<llo_original>
// kernel: tpu_custom_call.1
$region0: #{tpu_custom_call.1}
  #allocation0 [shape = 'u32[]', space=smem, size = 0x4, offset = 0x4, fixed_abs, tag = 'smem constant byte address 0x4 - core index']
  #allocation1 [shape = 'u32[72,128]{1,0:T(1,128)}', space=vmem, size = 0x9000, scoped, tag = 'internal scratch']
  #allocation2 [shape = 'f32[4,4]{1,0:T(4,128)}', space=vmem, size = 0x800, scoped, tag = 'scratch operand']
  %s0 = inlined_call_operand.hbm [shape: f32[2,4,256], index: 0, kind: input, shape index: {}]
  %s1 = inlined_call_operand.vmem [shape: f32[2,4,1], index: 1, kind: input, shape index: {}]
  %s2 = inlined_call_operand.vmem [shape: f32[2,4,1], index: 2, kind: output, shape index: {}]
  %s3 = sld [smem:[#allocation0]]
  $region53: #{tpu_custom_call.1} parent=0
    _
  %s5 = ssub.s32 1, %s3
  %s6 = scalar_select 0, %s5, %s3
  $region1: #{tpu_custom_call.1} parent=0
    #allocation3 [shape = 'u8[8192]{0}', space=vmem, size = 0x2000, scoped, tag = 'input window, operand 0']
    #allocation4 [shape = 's32[2]{0}', space=sflag, size = 0x8, scoped, tag = 'scoped memory for tpu_custom_call.1']
    %7 = vsyncpa [#allocation4], 0
    %s8 = scalar_lea.sflag [#allocation4], 1
    %9 = vsyncpa %s8, 0
    loop: start=0, step=1, limit=4
    $region2: #{tpu_custom_call.1} parent=1 // loop_pre_header
      _
    $region3: #{tpu_custom_call.1} parent=1 // loop_header
      %s11 = sphi 0, %s15
      %p12 = scmp.ge.s32.totalorder %s11, 4
      %s18 = sphi 0, %s30
      %s19 = sphi 0, %s26
      %s20 = sphi 0, %s18
      %s21 = sphi 0, %s19
      %s22 = sphi 0, %s20
      %s23 = sphi 0, %s21
      %s35 = sphi 0, %s37
      %s38 = sphi 0, %s35
      %s39 = sphi 0, %s38
      %s55 = sphi 0, %s39
      %s61 = sphi 0, %s63
      %s64 = sphi 0, %s61
      %s65 = sphi 0, %s64
      %s81 = sphi 0, %s65
      %s87 = sphi 0, %s89
      %s90 = sphi 0, %s87
      %s91 = sphi 0, %s90
      %s107 = sphi 0, %s91
    $region4: #{tpu_custom_call.1} parent=1 // loop_header_branch
      %14 = sbr.rel (%p12) target = $region8
    $region5: #{tpu_custom_call.1} parent=1 // loop_body
      %s16 = ssub.s32 %s11, 1
      %s17 = ssub.s32 %s11, 2
      %s24 = sadd.s32 1, %s19
      %p25 = scmp.ge.s32.totalorder %s24, 1
      %s26 = scalar_select %p25, 0, %s24
      %s27 = sadd.s32 1, %s18
      %s28 = scalar_select %p25, %s27, %s18
      %p29 = scmp.ge.s32.totalorder %s28, 2
      %s30 = scalar_select %p29, 0, %s28
      %s31 = ssub.s32 %s18, %s30
      %s32 = ssub.s32 %s19, %s26
      %s33 = sor.u32 %s31, %s32
      %p34 = scmp.eq.s32.totalorder %s33, 0
      %s36 = sadd.s32 %s35, 1
      %s37 = scalar_select %p34, %s35, %s36
      %p40 = pneg %p34
      %p41 = scmp.eq.s32.totalorder %s11, 1
      %p42 = por %p40, %p41
      %p43 = scmp.ne.s32.totalorder %s35, %s38
      %p44 = scmp.eq.s32.totalorder %s11, 0
      %p45 = por %p43, %p44
      %p46 = scmp.ne.s32.totalorder %s35, %s38
      %p47 = scmp.eq.s32.totalorder %s16, 1
      %p48 = por %p46, %p47
      %p49 = scmp.ne.s32.totalorder %s38, %s39
      %p50 = scmp.eq.s32.totalorder %s16, 0
      %p51 = por %p49, %p50
      %p52 = scmp.ne.s32.totalorder %s38, %s39
      %p53 = scmp.eq.s32.totalorder %s17, 1
      %p54 = por %p52, %p53
      %p56 = scmp.ne.s32.totalorder %s39, %s55
      %p57 = scmp.eq.s32.totalorder %s17, 0
      %p58 = por %p56, %p57
      %s59 = ssub.s32 %s18, %s30
      %p60 = scmp.eq.s32.totalorder %s59, 0
      %s62 = sadd.s32 %s61, 1
      %s63 = scalar_select %p60, %s61, %s62
      %p66 = pneg %p60
      %p67 = scmp.eq.s32.totalorder %s11, 1
      %p68 = por %p66, %p67
      %p69 = scmp.ne.s32.totalorder %s61, %s64
      %p70 = scmp.eq.s32.totalorder %s11, 0
      %p71 = por %p69, %p70
      %p72 = scmp.ne.s32.totalorder %s61, %s64
      %p73 = scmp.eq.s32.totalorder %s16, 1
      %p74 = por %p72, %p73
      %p75 = scmp.ne.s32.totalorder %s64, %s65
      %p76 = scmp.eq.s32.totalorder %s16, 0
      %p77 = por %p75, %p76
      %p78 = scmp.ne.s32.totalorder %s64, %s65
      %p79 = scmp.eq.s32.totalorder %s17, 1
      %p80 = por %p78, %p79
      %p82 = scmp.ne.s32.totalorder %s65, %s81
      %p83 = scmp.eq.s32.totalorder %s17, 0
      %p84 = por %p82, %p83
      %s85 = ssub.s32 %s18, %s30
      %p86 = scmp.eq.s32.totalorder %s85, 0
      %s88 = sadd.s32 %s87, 1
      %s89 = scalar_select %p86, %s87, %s88
      %p92 = pneg %p86
      %p93 = scmp.eq.s32.totalorder %s11, 1
      %p94 = por %p92, %p93
      %p95 = scmp.ne.s32.totalorder %s87, %s90
      %p96 = scmp.eq.s32.totalorder %s11, 0
      %p97 = por %p95, %p96
      %p98 = scmp.ne.s32.totalorder %s87, %s90
      %p99 = scmp.eq.s32.totalorder %s16, 1
      %p100 = por %p98, %p99
      %p101 = scmp.ne.s32.totalorder %s90, %s91
      %p102 = scmp.eq.s32.totalorder %s16, 0
      %p103 = por %p101, %p102
      %p104 = scmp.ne.s32.totalorder %s90, %s91
      %p105 = scmp.eq.s32.totalorder %s17, 1
      %p106 = por %p104, %p105
      %p108 = scmp.ne.s32.totalorder %s91, %s107
      %p109 = scmp.eq.s32.totalorder %s17, 0
      %p110 = por %p108, %p109
      %p111 = scmp.le.s32.totalorder 1, %s11
      %p112 = scmp.lt.s32.totalorder %s11, 3
      %p113 = pnand %p111, %p112
      %p114 = pneg %p113
      // Predicated region
      $region9: #{tpu_custom_call.1} parent=5 // pred_check
        _
      $region10: #{tpu_custom_call.1} parent=5 // pred_check_branch
        %116 = sbr.rel (%p113) target = $region12
      $region11: #{tpu_custom_call.1} parent=5 // pred_region
        %s117 = ssub.s32 %s11, 1
      $region12: #{tpu_custom_call.1} parent=5 // pred_fallthru
        _
      %p118 = scmp.lt.s32.totalorder %s11, 2
      // Predicated region
      $region13: #{tpu_custom_call.1} parent=5 // pred_check
        %p119 = pneg %p118
      $region14: #{tpu_custom_call.1} parent=5 // pred_check_branch
        %121 = sbr.rel (%p119) target = $region16
      $region15: #{tpu_custom_call.1} parent=5 // pred_region
        // Predicated region
        $region17: #{tpu_custom_call.1} parent=15 // pred_check
          %p122 = pneg %p45
        $region18: #{tpu_custom_call.1} parent=15 // pred_check_branch
          %124 = sbr.rel (%p122) target = $region20
        $region19: #{tpu_custom_call.1} parent=15 // pred_region
          %s125 = sand.u32 %s35, 1
          %s126 = scalar_lea.sflag [#allocation4], %s125
          %s127 = sand.u32 %s35, 1
          %s128 = smul.addr %s127, 8
          %s129 = scalar_lea.vmem [#allocation3], %s128
          %s130 = smul.u32 2, %s19
          %132 = vsyncadd %s126, 0
          %s133 = smul.addr %s18, 2
          %s134 = sadd.s32 %s130, %s133
          %s135 = smul.addr %s134, 4
          %s136 = scalar_lea.hbm %s0, %s135
          %s138 = sshll.u32 %s136, 4
          %s139 = int_to_ptr.hbm [resolvable:$true] %s138
          %s140 = sshll.u32 %s129, 4
          %s141 = int_to_ptr.vmem [resolvable:$true] %s140
          %143 = dma.hbm_to_vmem [thread:$0]  %s139, 128, %s141, %s126
        $region20: #{tpu_custom_call.1} parent=15 // pred_fallthru
          _
        // Predicated region
        $region21: #{tpu_custom_call.1} parent=15 // pred_check
          %p144 = pneg %p71
        $region22: #{tpu_custom_call.1} parent=15 // pred_check_branch
          %146 = sbr.rel (%p144) target = $region24
        $region23: #{tpu_custom_call.1} parent=15 // pred_region
          %p147 = scmp.lt.s32.totalorder %s18, 1
          %s148 = scalar_select %p147, %s18, 1
          %s149 = smul.addr %s148, 4
          %s150 = scalar_lea.vmem %s1, %s149
        $region24: #{tpu_custom_call.1} parent=15 // pred_fallthru
          _
      $region16: #{tpu_custom_call.1} parent=5 // pred_fallthru
        _
      %p151 = scmp.le.s32.totalorder 1, %s11
      %p152 = scmp.lt.s32.totalorder %s11, 3
      %p153 = pnand %p151, %p152
      %p154 = pneg %p153
      // Predicated region
      $region25: #{tpu_custom_call.1} parent=5 // pred_check
        _
      $region26: #{tpu_custom_call.1} parent=5 // pred_check_branch
        %156 = sbr.rel (%p153) target = $region28
      $region27: #{tpu_custom_call.1} parent=5 // pred_region
        %s157 = ssub.s32 %s11, 1
        %s158 = sand.u32 %s38, 1
        %s159 = scalar_lea.sflag [#allocation4], %s158
        %s160 = sand.u32 %s38, 1
        %s161 = smul.addr %s160, 8
        %s162 = scalar_lea.vmem [#allocation3], %s161
        // Predicated region
        $region29: #{tpu_custom_call.1} parent=27 // pred_check
          %p163 = pneg %p51
        $region30: #{tpu_custom_call.1} parent=27 // pred_check_branch
          %165 = sbr.rel (%p163) target = $region32
        $region31: #{tpu_custom_call.1} parent=27 // pred_region
          %167 = dma.done %s159, 128
        $region32: #{tpu_custom_call.1} parent=27 // pred_fallthru
          _
        %s168 = sand.u32 %s38, 1
        %s169 = scalar_lea.sflag [#allocation4], %s168
        %s170 = sand.u32 %s38, 1
        %s171 = smul.addr %s170, 8
        %s172 = scalar_lea.vmem [#allocation3], %s171
        %p173 = pneg %p51
        %p174 = pneg %p48
        %p175 = scmp.lt.s32.totalorder %s20, 1
        %s176 = scalar_select %p175, %s20, 1
        %s177 = smul.addr %s176, 4
        %s178 = scalar_lea.vmem %s1, %s177
        %p179 = pneg %p77
        %p180 = pneg %p74
        %p181 = pneg %p103
        %p182 = pneg %p100
        %p183 = scmp.lt.s32.totalorder %s20, 1
        %s184 = scalar_select %p183, %s20, 1
        %s185 = smul.addr %s184, 4
        %s186 = scalar_lea.vmem %s2, %s185
        %s187 = smul.u32 2, %s21
        %p188 = scmp.lt.s32.totalorder %s20, 1
        %s189 = scalar_select %p188, %s20, 1
        %s190 = smul.addr %s189, 4
        %s191 = scalar_lea.vmem %s1, %s190
        %p192 = scmp.lt.s32.totalorder %s20, 1
        %s193 = scalar_select %p192, %s20, 1
        %s194 = smul.addr %s193, 4
        %s195 = scalar_lea.vmem %s2, %s194
        %p196 = scmp.eq.s32.totalorder %s21, 0
        // Predicated region
        $region33: #{tpu_custom_call.1} parent=27 // pred_check
          %p197 = pneg %p196
        $region34: #{tpu_custom_call.1} parent=27 // pred_check_branch
          %199 = sbr.rel (%p197) target = $region36
        $region35: #{tpu_custom_call.1} parent=27 // pred_region
          %vm200 = vcmask 27648
          %201 = vst.msk [vmem:[#allocation2] sm:$0xf] %vm200, 0.0
        $region36: #{tpu_custom_call.1} parent=27 // pred_fallthru
          _
        %v202 = vld [vmem:[%s162] sm:$0xff]
        %v203 = vld [vmem:[#allocation2] sm:$0xf]
        %205 = vst [vmem:[#allocation1] ss:$2 sm:$0xff] %v202
        %v206 = vld.sshfl [vmem:[#allocation1] sm:$0xff pattern:$0x75316420]
        %v207 = vld.sshfl [vmem:[#allocation1 + $0x8] sm:$0xff pattern:$0x75316420]
        %210 = vst [vmem:[#allocation1] ss:$2 sm:$0xff] %v202
        %v211 = vld.sshfl [vmem:[#allocation1] sm:$0xff pattern:$0x75316420]
        %v212 = vld.sshfl [vmem:[#allocation1 + $0x8] sm:$0xff pattern:$0x75316420]
        %215 = vmatpush.xpose.msra.mxu0 0.0
        %216 = vmatpush.xpose.msra.mxu0 0.0
        %217 = vmatpush.xpose.msra.mxu0 0.0
        %218 = vmatpush.xpose.msra.mxu0 0.0
        %219 = vmatpush.xpose.msra.mxu0 0.0
        %220 = vmatpush.xpose.msra.mxu0 0.0
        %221 = vmatpush.xpose.msra.mxu0 0.0
        %222 = vmatpush.xpose.msra.mxu0 0.0
        %223 = vmatpush.xpose.msra.mxu0 0.0
        %224 = vmatpush.xpose.msra.mxu0 0.0
        %225 = vmatpush.xpose.msra.mxu0 0.0
        %226 = vmatpush.xpose.msra.mxu0 0.0
        %227 = vmatpush.xpose.msra.mxu0 0.0
        %228 = vmatpush.xpose.msra.mxu0 0.0
        %229 = vmatpush.xpose.msra.mxu0 0.0
        %230 = vmatpush.xpose.msra.mxu0 %v211
        %231 = vmatmul.f32.gmra.mxu0 %v206
        %v232 = vpop.f32.mrf.mxu0
        %v233 = vadd.f32 0.0, %v232
        %234 = vdwg.mxu0
        %235 = vmatpush.xpose.msra.mxu0 0.0
        %236 = vmatpush.xpose.msra.mxu0 0.0
        %237 = vmatpush.xpose.msra.mxu0 0.0
        %238 = vmatpush.xpose.msra.mxu0 0.0
        %239 = vmatpush.xpose.msra.mxu0 0.0
        %240 = vmatpush.xpose.msra.mxu0 0.0
        %241 = vmatpush.xpose.msra.mxu0 0.0
        %242 = vmatpush.xpose.msra.mxu0 0.0
        %243 = vmatpush.xpose.msra.mxu0 0.0
        %244 = vmatpush.xpose.msra.mxu0 0.0
        %245 = vmatpush.xpose.msra.mxu0 0.0
        %246 = vmatpush.xpose.msra.mxu0 0.0
        %247 = vmatpush.xpose.msra.mxu0 0.0
        %248 = vmatpush.xpose.msra.mxu0 0.0
        %249 = vmatpush.xpose.msra.mxu0 0.0
        %250 = vmatpush.xpose.msra.mxu0 %v212
        %251 = vmatmul.f32.gmra.mxu0 %v207
        %v252 = vpop.f32.mrf.mxu0
        %v253 = vadd.f32 %v233, %v252
        %254 = vdwg.mxu0
        %v255 = vadd.f32 %v203, %v253
        %vm256 = vcmask 27648
        %257 = vst.msk [vmem:[#allocation2] sm:$0xf] %vm256, %v255
        // Predicated region
        $region37: #{tpu_custom_call.1} parent=27 // pred_check
          %p258 = pneg %p196
        $region38: #{tpu_custom_call.1} parent=27 // pred_check_branch
          %260 = sbr.rel (%p258) target = $region40
        $region39: #{tpu_custom_call.1} parent=27 // pred_region
          %v261 = vld [vmem:[#allocation2] sm:$0xf]
          %v262 = vld [vmem:[%s191] sm:$0xf]
          %vm263 = vcmask 31744
          %v265 = vsel %vm263, %v261, 0
          %vm267 = vcmask 1043456
          %v269 = vsel %vm267, %v262, 0
          %271 = vmatpush.msra.mxu0 0.0
          %272 = vmatpush.msra.mxu0 0.0
          %273 = vmatpush.msra.mxu0 0.0
          %274 = vmatpush.msra.mxu0 0.0
          %275 = vmatpush.msra.mxu0 0.0
          %276 = vmatpush.msra.mxu0 0.0
          %277 = vmatpush.msra.mxu0 0.0
          %278 = vmatpush.msra.mxu0 0.0
          %279 = vmatpush.msra.mxu0 0.0
          %280 = vmatpush.msra.mxu0 0.0
          %281 = vmatpush.msra.mxu0 0.0
          %282 = vmatpush.msra.mxu0 0.0
          %283 = vmatpush.msra.mxu0 0.0
          %284 = vmatpush.msra.mxu0 0.0
          %285 = vmatpush.msra.mxu0 0.0
          %286 = vmatpush.msra.mxu0 %v269
          %287 = vmatmul.f32.gmra.mxu0 %v265
          %v288 = vpop.f32.mrf.mxu0
          %v289 = vadd.f32 0.0, %v288
          %290 = vdwg.mxu0
          %v292 = vsel %vm267, %v289, 0
          %294 = vmatpush.msra.mxu0 0.0
          %295 = vmatpush.msra.mxu0 0.0
          %296 = vmatpush.msra.mxu0 0.0
          %297 = vmatpush.msra.mxu0 0.0
          %298 = vmatpush.msra.mxu0 0.0
          %299 = vmatpush.msra.mxu0 0.0
          %300 = vmatpush.msra.mxu0 0.0
          %301 = vmatpush.msra.mxu0 0.0
          %302 = vmatpush.msra.mxu0 0.0
          %303 = vmatpush.msra.mxu0 0.0
          %304 = vmatpush.msra.mxu0 0.0
          %305 = vmatpush.msra.mxu0 0.0
          %306 = vmatpush.msra.mxu0 0.0
          %307 = vmatpush.msra.mxu0 0.0
          %308 = vmatpush.msra.mxu0 0.0
          %309 = vmatpush.msra.mxu0 %v292
          %310 = vmatmul.f32.gmra.mxu0 %v265
          %v311 = vpop.f32.mrf.mxu0
          %v312 = vadd.f32 0.0, %v311
          %313 = vdwg.mxu0
          %v314 = vmul.f32 %v312, %v312
          %vm315 = vcmask 3072
          %v316 = vsel %vm315, %v314, 0.0
          %v317 = vrot.slane %v316, 4
          %v318 = vadd.f32 %v316, %v317
          %v319 = vrot.slane %v318, 2
          %v320 = vadd.f32 %v318, %v319
          %v321 = vrot.slane %v320, 1
          %v322 = vadd.f32 %v320, %v321
          %v323 = vmax.f32 %v322, 1e-24
          %v324 = vrsqrt.pop %v323
          %v325 = vmul.f32 %v324, %v323
          %v326 = vmul.f32 %v325, %v324
          %v327 = vmul.f32 0.5, %v326
          %v328 = vsub.f32 1.5, %v327
          %v329 = vmul.f32 %v324, %v328
          %vm330 = vweird.f32 %v323
          %vm331 = vweird.f32 %v324
          %vm332 = vmor %vm330, %vm331
          %v333 = vsel %vm332, %v324, %v329
          %v334 = vmul.f32 %v312, %v333
          %335 = vst.msk [vmem:[%s195] sm:$0xf] %vm315, %v334
        $region40: #{tpu_custom_call.1} parent=27 // pred_fallthru
          _
        %p336 = scmp.lt.s32.totalorder %s20, 1
        %s337 = scalar_select %p336, %s20, 1
        %s338 = smul.addr %s337, 4
        %s339 = scalar_lea.vmem %s2, %s338
        // Predicated region
        $region41: #{tpu_custom_call.1} parent=27 // pred_check
          %p340 = pneg %p100
        $region42: #{tpu_custom_call.1} parent=27 // pred_check_branch
          %342 = sbr.rel (%p340) target = $region44
        $region43: #{tpu_custom_call.1} parent=27 // pred_region
          _
        $region44: #{tpu_custom_call.1} parent=27 // pred_fallthru
          _
      $region28: #{tpu_custom_call.1} parent=5 // pred_fallthru
        _
      %p343 = scmp.le.s32.totalorder 2, %s11
      // Predicated region
      $region45: #{tpu_custom_call.1} parent=5 // pred_check
        %p344 = pneg %p343
      $region46: #{tpu_custom_call.1} parent=5 // pred_check_branch
        %346 = sbr.rel (%p344) target = $region48
      $region47: #{tpu_custom_call.1} parent=5 // pred_region
        %s347 = ssub.s32 %s11, 2
        // Predicated region
        $region49: #{tpu_custom_call.1} parent=47 // pred_check
          %p348 = pneg %p106
        $region50: #{tpu_custom_call.1} parent=47 // pred_check_branch
          %350 = sbr.rel (%p348) target = $region52
        $region51: #{tpu_custom_call.1} parent=47 // pred_region
          %p351 = scmp.lt.s32.totalorder %s22, 1
          %s352 = scalar_select %p351, %s22, 1
          %s353 = smul.addr %s352, 4
          %s354 = scalar_lea.vmem %s2, %s353
        $region52: #{tpu_custom_call.1} parent=47 // pred_fallthru
          _
      $region48: #{tpu_custom_call.1} parent=5 // pred_fallthru
        _
    $region6: #{tpu_custom_call.1} parent=1 // loop_footer
      %s15 = sadd.s32 1, %s11
    $region7: #{tpu_custom_call.1} parent=1 // loop_footer_branch
      %10 = sbr.rel target = $region3
    $region8: #{tpu_custom_call.1} parent=1 // loop_exit
      _
    %355 = vsyncpa [#allocation4], 1
    %s356 = scalar_lea.sflag [#allocation4], 1
    %357 = vsyncpa %s356, 1

</llo_original>
